<compile_context>
chip_gen: v7x
topology: tpu7x:2x2x1
jax: 0.10.0
libtpu: 0.0.40
codegen_flags: <defaults>
</compile_context>

<pallas_src>
import functools

import jax
import jax.numpy as jnp
from jax.experimental import pallas as pl
from jax.experimental.pallas import tpu as pltpu

LANE = 128


@functools.lru_cache(maxsize=1)
def _chip_tuning():
    """Return (max_tile_rows, num_cores) tuned per TPU generation."""
    try:
        kind = jax.devices()[0].device_kind.lower()
    except Exception:
        kind = ""
    if "v7" in kind:
        return 8192, 2        # 2 TensorCores/chip: shard row blocks across them
    if "v6" in kind:
        return 8192, 1        # 4 MiB/input/buffer -> ~16 MiB double-buffered
    return 4096, 1            # conservative for v5e-class chips


def _make_kernel(tile_rows, per_core, nblocks, last_valid_rows, may_overrun):
    """Build the streaming-reduce kernel body (all args are Python constants)."""
    last_is_partial = last_valid_rows < tile_rows

    def accumulate(acc_ref, v):
        # Sublane-reduce the (tile_rows, LANE) tile into one (1, LANE) row:
        # vreg-wise VALU adds, one tiny in-vreg sublane reduce per step.
        acc_ref[...] += jnp.sum(v, axis=0, keepdims=True)

    def kernel(y_ref, yp_ref, out_ref, acc_ref):
        i = pl.program_id(1)
        block_idx = pl.program_id(0) * per_core + i

        @pl.when(i == 0)
        def _():
            acc_ref[...] = jnp.zeros_like(acc_ref)

        ey = y_ref[...].astype(jnp.float32) - yp_ref[...].astype(jnp.float32)
        # 2*x/(1+exp(-x)) - x == x*(2*sigmoid(x) - 1) == x*tanh(x/2)  (EUP tanh)
        val = ey * jnp.tanh(0.5 * ey)

        if not last_is_partial and not may_overrun:
            # Every block is full and valid: unmasked fast path only.
            accumulate(acc_ref, val)
        elif last_is_partial:
            @pl.when(block_idx < nblocks - 1)
            def _():
                accumulate(acc_ref, val)

            @pl.when(block_idx == nblocks - 1)
            def _():
                # Mask only the partial last block; the bound is a trace-time
                # constant (row-level compare, no flat-index int32 overflow).
                row_id = jax.lax.broadcasted_iota(jnp.int32, val.shape, 0)
                accumulate(acc_ref, jnp.where(row_id < last_valid_rows, val, 0.0))
            # Clamped duplicate blocks (block_idx >= nblocks) fall through: no add.
        else:
            # All real blocks are full; only guard against the clamped duplicate
            # block a core may see when nblocks % num_cores != 0.
            @pl.when(block_idx < nblocks)
            def _():
                accumulate(acc_ref, val)

        @pl.when(i == pl.num_programs(1) - 1)
        def _():
            out_ref[0, 0] = jnp.sum(acc_ref[...])

    return kernel


def xsigmoid_loss(y_t: jax.Array, y_prime_t: jax.Array) -> jax.Array:
    assert y_t.shape == y_prime_t.shape, "inputs must have the same shape"
    n = y_t.size
    assert n > 0

    y_flat = jnp.ravel(y_t)
    yp_flat = jnp.ravel(y_prime_t)

    rows = n // LANE
    main = rows * LANE

    # <128-element ragged lane tail handled host-side (no jnp.pad full copy).
    tail_sum = jnp.float32(0.0)
    if main < n:
        tey = y_flat[main:].astype(jnp.float32) - yp_flat[main:].astype(jnp.float32)
        tail_sum = jnp.sum(tey * jnp.tanh(0.5 * tey))

    if rows == 0:
        # Tiny input (< 128 elements): pure-JAX fallback.
        return tail_sum / jnp.float32(n)

    y2d = y_flat[:main].reshape(rows, LANE)
    yp2d = yp_flat[:main].reshape(rows, LANE)

    max_tile_rows, num_cores = _chip_tuning()
    tile_rows = rows if rows <= max_tile_rows else max_tile_rows
    nblocks = pl.cdiv(rows, tile_rows)
    num_cores = min(num_cores, nblocks)         # no point in a 2nd core for 1 block
    per_core = pl.cdiv(nblocks, num_cores)
    may_overrun = num_cores * per_core > nblocks
    last_valid_rows = rows - (nblocks - 1) * tile_rows

    def row_map(c, i):
        b = c * per_core + i
        if may_overrun:
            b = jnp.minimum(b, nblocks - 1)     # never DMA out of bounds
        return (b, 0)

    kernel = _make_kernel(tile_rows, per_core, nblocks, last_valid_rows, may_overrun)

    bytes_in = n * (jnp.dtype(y_t.dtype).itemsize + jnp.dtype(y_prime_t.dtype).itemsize)
    cost = pl.CostEstimate(flops=5 * n, transcendentals=n, bytes_accessed=bytes_in + 8)

    partials = pl.pallas_call(
        kernel,
        out_shape=jax.ShapeDtypeStruct((num_cores, 1), jnp.float32),
        grid_spec=pltpu.PrefetchScalarGridSpec(
            num_scalar_prefetch=0,
            grid=(num_cores, per_core),
            in_specs=[
                pl.BlockSpec((tile_rows, LANE), row_map),
                pl.BlockSpec((tile_rows, LANE), row_map),
            ],
            out_specs=pl.BlockSpec(
                (1, 1), lambda c, i: (c, 0), memory_space=pltpu.SMEM
            ),
            scratch_shapes=[pltpu.VMEM((1, LANE), jnp.float32)],
        ),
        compiler_params=pltpu.CompilerParams(
            dimension_semantics=("parallel", "arbitrary"),
            vmem_limit_bytes=32 * 1024 * 1024,
        ),
        cost_estimate=cost,
    )(y2d, yp2d)

    return (jnp.sum(partials) + tail_sum) / jnp.float32(n)


def xsigmoid_loss_ref(y_t, y_prime_t):
    ey = y_t.astype(jnp.float32) - y_prime_t.astype(jnp.float32)
    return jnp.mean(2.0 * ey / (1.0 + jnp.exp(-ey)) - ey)


if __name__ == "__main__":
    key = jax.random.PRNGKey(0)
    k1, k2 = jax.random.split(key)
    # Small shapes consistent with a generic regression target.
    shape = (2, 4, 16, 16)
    y_t = jax.random.normal(k1, shape, dtype=jnp.float32)
    y_prime_t = jax.random.normal(k2, shape, dtype=jnp.float32)

    loss = xsigmoid_loss(y_t, y_prime_t)
    jax.block_until_ready(loss)

    ref = xsigmoid_loss_ref(y_t, y_prime_t)
    assert jnp.allclose(loss, ref, rtol=1e-5, atol=1e-5), (loss, ref)
    print("KERNEL_OK")
</pallas_src>

<mosaic_0001>
module attributes {stable_mosaic.version = 11 : i64} {
  func.func @kernel(%arg0: i32, %arg1: i32, %arg2: memref<16x128xf32, #tpu.memory_space<vmem>>, %arg3: memref<16x128xf32, #tpu.memory_space<vmem>>, %arg4: memref<1x1xf32, #tpu.memory_space<smem>>, %arg5: memref<1x128xf32, #tpu.memory_space<vmem>>) attributes {dimension_semantics = [#tpu.dimension_semantics<parallel>, #tpu.dimension_semantics<arbitrary>], iteration_bounds = array<i64: 1, 1>, scalar_prefetch = 0 : i64, scratch_operands = 1 : i64, tpu.core_type = #tpu.core_type<tc>, window_params = [{transform_indices = @transform_0, window_bounds = array<i64: 16, 128>}, {transform_indices = @transform_1, window_bounds = array<i64: 16, 128>}, {transform_indices = @transform_2, window_bounds = array<i64: 1, 1>}]} {
    %c0_i32 = arith.constant 0 : i32
    %0 = arith.cmpi eq, %arg1, %c0_i32 : i32
    %1 = arith.extui %0 : i1 to i32
    %c0_i32_0 = arith.constant 0 : i32
    %2 = arith.cmpi ne, %1, %c0_i32_0 : i32
    scf.if %2 {
      %cst_11 = arith.constant 0.000000e+00 : f32
      %18 = vector.broadcast %cst_11 : f32 to vector<1x128xf32>
      %c0_12 = arith.constant 0 : index
      %c0_13 = arith.constant 0 : index
      %19 = vector.load %arg5[%c0_12, %c0_13] : memref<1x128xf32, #tpu.memory_space<vmem>>, vector<1x128xf32>
      tpu.vector_store %arg5[%c0_12, %c0_13], %18 {strides = array<i32>} : memref<1x128xf32, #tpu.memory_space<vmem>>, vector<1x128xf32>,
    } else {
    }
    %c0 = arith.constant 0 : index
    %c0_1 = arith.constant 0 : index
    %3 = vector.load %arg2[%c0, %c0_1] : memref<16x128xf32, #tpu.memory_space<vmem>>, vector<16x128xf32>
    %c0_2 = arith.constant 0 : index
    %c0_3 = arith.constant 0 : index
    %4 = vector.load %arg3[%c0_2, %c0_3] : memref<16x128xf32, #tpu.memory_space<vmem>>, vector<16x128xf32>
    %5 = arith.subf %3, %4 : vector<16x128xf32>
    %cst = arith.constant 5.000000e-01 : f32
    %6 = vector.broadcast %cst : f32 to vector<16x128xf32>
    %7 = arith.mulf %6, %5 : vector<16x128xf32>
    %8 = math.tanh %7 : vector<16x128xf32>
    %9 = arith.mulf %5, %8 : vector<16x128xf32>
    %c0_4 = arith.constant 0 : index
    %c0_5 = arith.constant 0 : index
    %10 = vector.load %arg5[%c0_4, %c0_5] : memref<1x128xf32, #tpu.memory_space<vmem>>, vector<1x128xf32>
    %cst_6 = arith.constant dense<0.000000e+00> : vector<128xf32>
    %11 = vector.multi_reduction <add>, %9, %cst_6 [0] : vector<16x128xf32> to vector<128xf32>
    %12 = vector.shape_cast %11 : vector<128xf32> to vector<1x128xf32>
    %13 = arith.addf %10, %12 : vector<1x128xf32>
    %c0_7 = arith.constant 0 : index
    %c0_8 = arith.constant 0 : index
    %14 = vector.load %arg5[%c0_7, %c0_8] : memref<1x128xf32, #tpu.memory_space<vmem>>, vector<1x128xf32>
    tpu.vector_store %arg5[%c0_7, %c0_8], %13 {strides = array<i32>} : memref<1x128xf32, #tpu.memory_space<vmem>>, vector<1x128xf32>,
    %c0_i32_9 = arith.constant 0 : i32
    %15 = arith.cmpi eq, %arg1, %c0_i32_9 : i32
    %16 = arith.extui %15 : i1 to i32
    %c0_i32_10 = arith.constant 0 : i32
    %17 = arith.cmpi ne, %16, %c0_i32_10 : i32
    scf.if %17 {
      %c0_11 = arith.constant 0 : index
      %c0_12 = arith.constant 0 : index
      %18 = vector.load %arg5[%c0_11, %c0_12] : memref<1x128xf32, #tpu.memory_space<vmem>>, vector<1x128xf32>
      %19 = vector.shape_cast %18 : vector<1x128xf32> to vector<1x1x128xf32>
      %cst_13 = arith.constant dense<0.000000e+00> : vector<1xf32>
      %20 = vector.multi_reduction <add>, %19, %cst_13 [1, 2] : vector<1x1x128xf32> to vector<1xf32>
      %21 = vector.shape_cast %20 : vector<1xf32> to vector<1x1x1xf32>
      %22 = vector.extract %21[0, 0, 0] : f32 from vector<1x1x1xf32>
      %c0_14 = arith.constant 0 : index
      %c0_15 = arith.constant 0 : index
      %23 = memref.load %arg4[%c0_14, %c0_15] : memref<1x1xf32, #tpu.memory_space<smem>>
      memref.store %22, %arg4[%c0_14, %c0_15] : memref<1x1xf32, #tpu.memory_space<smem>>
    } else {
    }
    return
  }
  func.func @transform_0(%arg0: i32, %arg1: i32) -> (i32, i32) {
    %c1_i32 = arith.constant 1 : i32
    %0 = arith.muli %arg0, %c1_i32 : i32
    %1 = arith.addi %0, %arg1 : i32
    %c0_i32 = arith.constant 0 : i32
    %c0_i32_0 = arith.constant 0 : i32
    return %1, %c0_i32 : i32, i32
  }
  func.func @transform_1(%arg0: i32, %arg1: i32) -> (i32, i32) {
    %c1_i32 = arith.constant 1 : i32
    %0 = arith.muli %arg0, %c1_i32 : i32
    %1 = arith.addi %0, %arg1 : i32
    %c0_i32 = arith.constant 0 : i32
    %c0_i32_0 = arith.constant 0 : i32
    return %1, %c0_i32 : i32, i32
  }
  func.func @transform_2(%arg0: i32, %arg1: i32) -> (i32, i32) {
    %c0_i32 = arith.constant 0 : i32
    %c0_i32_0 = arith.constant 0 : i32
    return %arg0, %c0_i32 : i32, i32
  }
}

</mosaic_0001>

<llo_original>
// kernel: tpu_custom_call.1
$region0: #{tpu_custom_call.1}
  #allocation0 [shape = 'u32[]', space=smem, size = 0x4, offset = 0x4, fixed_abs, tag = 'smem constant byte address 0x4 - core index']
  #allocation1 [shape = 'u32[144,128]{1,0:T(1,128)}', space=vmem, size = 0x12000, scoped, tag = 'internal scratch']
  #allocation2 [shape = 'f32[1,128]{1,0:T(1,128)}', space=vmem, size = 0x200, scoped, tag = 'scratch operand']
  %s0 = inlined_call_operand.hbm [shape: f32[16,128], index: 0, kind: input, shape index: {}]
  %s1 = inlined_call_operand.hbm [shape: f32[16,128], index: 1, kind: input, shape index: {}]
  %s2 = inlined_call_operand.hbm [shape: f32[1,1], index: 2, kind: output, shape index: {}]
  %s3 = sld [smem:[#allocation0]]
  $region34: #{tpu_custom_call.1} parent=0
    _
  %s5 = ssub.s32 1, %s3
  %s6 = scalar_select 0, %s5, %s3
  $region1: #{tpu_custom_call.1} parent=0
    #allocation3 [shape = 'u8[8192]{0}', space=vmem, size = 0x2000, scoped, tag = 'input window, operand 0, single buffered']
    #allocation4 [shape = 's32[1]{0}', space=sflag, size = 0x4, scoped, tag = 'scoped memory for tpu_custom_call.1']
    #allocation5 [shape = 's32[1]{0}', space=sflag, size = 0x4, scoped, tag = 'scoped memory for tpu_custom_call.1']
    #allocation6 [shape = 'u8[8192]{0}', space=vmem, size = 0x2000, scoped, tag = 'input window, operand 1, single buffered']
    #allocation7 [shape = 's32[1]{0}', space=sflag, size = 0x4, scoped, tag = 'scoped memory for tpu_custom_call.1']
    #allocation8 [shape = 'u8[512]{0}', space=smem, size = 0x200, scoped, tag = 'output window, operand 0, single buffered']
    %7 = vsyncpa [#allocation4], 0
    %8 = vsyncpa [#allocation7], 0
    %9 = vsyncpa [#allocation5], 0
    // Predicated region
    $region2: #{tpu_custom_call.1} parent=1 // pred_check
      _
    $region3: #{tpu_custom_call.1} parent=1 // pred_check_branch
      %11 = sbr.rel (0) target = $region5
    $region4: #{tpu_custom_call.1} parent=1 // pred_region
      %s12 = sadd.s32 0, 0
      %s13 = smul.u32 2, %s12
      %s15 = ssub.s32 256, 256
      %16 = vsyncadd [#allocation4], %s15
      %s17 = smul.addr %s13, 128
      %s18 = scalar_lea.hbm %s0, %s17
      %s19 = sshll.u32 [#allocation3], 4
      %s20 = int_to_ptr.vmem [resolvable:$true] %s19
      %25 = dma.hbm_to_vmem [thread:$0]  %s18, 256, %s20, [#allocation4], 128, 128, 8
    $region5: #{tpu_custom_call.1} parent=1 // pred_fallthru
      _
    // Predicated region
    $region6: #{tpu_custom_call.1} parent=1 // pred_check
      _
    $region7: #{tpu_custom_call.1} parent=1 // pred_check_branch
      %27 = sbr.rel (0) target = $region9
    $region8: #{tpu_custom_call.1} parent=1 // pred_region
      %s28 = sadd.s32 0, 0
      %s29 = smul.u32 2, %s28
      %s31 = ssub.s32 256, 256
      %32 = vsyncadd [#allocation7], %s31
      %s33 = smul.addr %s29, 128
      %s34 = scalar_lea.hbm %s1, %s33
      %s35 = sshll.u32 [#allocation6], 4
      %s36 = int_to_ptr.vmem [resolvable:$true] %s35
      %41 = dma.hbm_to_vmem [thread:$0]  %s34, 256, %s36, [#allocation7], 128, 128, 8
    $region9: #{tpu_custom_call.1} parent=1 // pred_fallthru
      _
    // Predicated region
    $region10: #{tpu_custom_call.1} parent=1 // pred_check
      _
    $region11: #{tpu_custom_call.1} parent=1 // pred_check_branch
      %43 = sbr.rel (0) target = $region13
    $region12: #{tpu_custom_call.1} parent=1 // pred_region
      %44 = dma.done [#allocation4], 256
    $region13: #{tpu_custom_call.1} parent=1 // pred_fallthru
      _
    // Predicated region
    $region14: #{tpu_custom_call.1} parent=1 // pred_check
      _
    $region15: #{tpu_custom_call.1} parent=1 // pred_check_branch
      %46 = sbr.rel (0) target = $region17
    $region16: #{tpu_custom_call.1} parent=1 // pred_region
      %47 = dma.done [#allocation7], 256
    $region17: #{tpu_custom_call.1} parent=1 // pred_fallthru
      _
    %s48 = sadd.s32 0, 0
    %s49 = smul.u32 2, %s48
    %s50 = sadd.s32 0, 0
    %s51 = smul.u32 2, %s50
    %p52 = scmp.eq.s32.totalorder 0, 0
    // Predicated region
    $region18: #{tpu_custom_call.1} parent=1 // pred_check
      %p53 = pneg %p52
    $region19: #{tpu_custom_call.1} parent=1 // pred_check_branch
      %55 = sbr.rel (%p53) target = $region21
    $region20: #{tpu_custom_call.1} parent=1 // pred_region
      %56 = vst [vmem:[#allocation2] sm:$0x1] 0.0
    $region21: #{tpu_custom_call.1} parent=1 // pred_fallthru
      _
    %v57 = vld [vmem:[#allocation3] sm:$0xff]
    %v58 = vld [vmem:[#allocation3 + $0x8] sm:$0xff]
    %v59 = vld [vmem:[#allocation6] sm:$0xff]
    %v60 = vld [vmem:[#allocation6 + $0x8] sm:$0xff]
    %v61 = vsub.f32 %v57, %v59
    %v62 = vsub.f32 %v58, %v60
    %v63 = vmul.f32 %v61, 0.5
    %v64 = vmul.f32 %v62, 0.5
    %v65 = vtanh.pop %v63
    %v66 = vtanh.pop %v64
    %v67 = vmul.f32 %v61, %v65
    %v68 = vmul.f32 %v62, %v66
    %v69 = vld [vmem:[#allocation2] sm:$0x1]
    %v70 = vadd.f32 %v67, %v68
    %v71 = vrot.slane %v70, 4
    %v72 = vadd.f32 %v70, %v71
    %v73 = vrot.slane %v72, 2
    %v74 = vadd.f32 %v72, %v73
    %v75 = vrot.slane %v74, 1
    %v76 = vadd.f32 %v74, %v75
    %v77 = vadd.f32 %v69, %v76
    %78 = vst [vmem:[#allocation2] sm:$0x1] %v77
    // Predicated region
    $region22: #{tpu_custom_call.1} parent=1 // pred_check
      %p79 = pneg %p52
    $region23: #{tpu_custom_call.1} parent=1 // pred_check_branch
      %81 = sbr.rel (%p79) target = $region25
    $region24: #{tpu_custom_call.1} parent=1 // pred_region
      %v82 = vld [vmem:[#allocation2] sm:$0x1]
      %vm83 = vcmask 1040384
      %v84 = vsel %vm83, %v82, 0.0
      %85 = vadd.xlane.f32.xlu0 %v84
      %v86 = vpop.xlane.xlu0 %85
      %v87 = vrot.slane %v86, 4
      %v88 = vadd.f32 %v86, %v87
      %v89 = vrot.slane %v88, 2
      %v90 = vadd.f32 %v88, %v89
      %v91 = vrot.slane %v90, 1
      %v92 = vadd.f32 %v90, %v91
      %s93 = vtos %v92
      %s94 = scalar_lea.smem [#allocation8], 0
      %95 = sst [smem:[%s94]] %s93
    $region25: #{tpu_custom_call.1} parent=1 // pred_fallthru
      _
    // Predicated region
    $region26: #{tpu_custom_call.1} parent=1 // pred_check
      _
    $region27: #{tpu_custom_call.1} parent=1 // pred_check_branch
      %97 = sbr.rel (0) target = $region29
    $region28: #{tpu_custom_call.1} parent=1 // pred_region
      %s99 = ssub.s32 16, 16
      %100 = vsyncadd [#allocation5], %s99
      %103 = dma.smem_to_hbm [#allocation8], 16, %s2, [#allocation5]
    $region29: #{tpu_custom_call.1} parent=1 // pred_fallthru
      _
    // Predicated region
    $region30: #{tpu_custom_call.1} parent=1 // pred_check
      _
    $region31: #{tpu_custom_call.1} parent=1 // pred_check_branch
      %105 = sbr.rel (0) target = $region33
    $region32: #{tpu_custom_call.1} parent=1 // pred_region
      %106 = dma.done [#allocation5], 16
    $region33: #{tpu_custom_call.1} parent=1 // pred_fallthru
      _
    %107 = sfence
    %108 = vsyncpa [#allocation4], 1
    %109 = vsyncpa [#allocation7], 1
    %110 = vsyncpa [#allocation5], 1

</llo_original>
